<compile_context>
chip_gen: v6e
topology: v6e:2x2x1
jax: 0.10.0
libtpu: 0.0.40
codegen_flags: <defaults>
</compile_context>

<pallas_src>
import jax
import jax.numpy as jnp
from jax.experimental import pallas as pl
from jax.experimental.pallas import tpu as pltpu

EPS = 1e-6

# Conservative per-step tile budget: 2 inputs x 2 pipeline buffers must fit
# with headroom inside the scoped-VMEM limit on every chip generation.
_VMEM_TILE_BUDGET_BYTES = 20 * 1024 * 1024
_VMEM_LIMIT_BYTES = 32 * 1024 * 1024


def _get_weight_map(dims, min_thresh=9, max_thresh=20, inverted=False):
    """JAX re-implementation of the torch/scipy weight-map generator.

    For (1, H, W) dims, scipy.ndimage.distance_transform_edt on (1 - tmp[0])
    is the Euclidean distance to the single center pixel at
    (dims[2] // 2, dims[2] // 2), computed here in closed form.
    """
    # TODO(synk): the len(dims)==4 branch (3-D EDT) is not needed for the
    # (1, H, W) configuration exercised here and is not implemented.
    H, W = dims[1], dims[2]
    cy = dims[2] // 2
    cx = dims[2] // 2
    yy = jnp.arange(H, dtype=jnp.float32)[:, None]
    xx = jnp.arange(W, dtype=jnp.float32)[None, :]
    dst = jnp.sqrt((yy - cy) ** 2 + (xx - cx) ** 2)
    if inverted:
        wm = 1.0 - dst + jnp.abs(jnp.min(1.0 - dst))
    else:
        wm = dst
    wm = jnp.where(wm > max_thresh, float(max_thresh), wm)
    wm = jnp.where(wm < min_thresh, 0.0, wm)
    return wm[None]  # (1, H, W), float32


def _choose_tiles(N, C, HW, itemsize):
    """Pick (batch_tile, hw_tile) so 2 inputs x 2 pipeline buffers fit the budget."""
    per_row_hw_byte = 2 * 2 * C * itemsize          # bytes / (batch-row, hw-elem)
    rows_fit = _VMEM_TILE_BUDGET_BYTES // (per_row_hw_byte * HW)

    if rows_fit >= N:
        return N, HW                                 # whole problem in one block
    if rows_fit >= 8:
        # Whole HW per step, 8-aligned batch tile (output block sublane rule).
        return min((rows_fit // 8) * 8, N), HW

    # Fewer than 8 full batch rows fit: fix the batch tile and chunk HW instead.
    tn = min(8, N)                                   # tn == N when N < 8 (full-dim block ok)
    max_thw = _VMEM_TILE_BUDGET_BYTES // (per_row_hw_byte * tn)
    if max_thw >= HW:
        return tn, HW
    thw = (max_thw // 128) * 128                     # lane-aligned chunk that divides HW
    while thw >= 128 and HW % thw != 0:
        thw -= 128
    if thw < 128:
        # TODO(synk): no lane-aligned divisor of HW fits the budget; fall back to
        # the full spatial extent and rely on the raised vmem limit.
        thw = HW
    return tn, thw


def _correction_coeff_kernel(yp_ref, yt_ref, w_ref, coeff_ref, inter_acc, union_acc):
    """One grid step: accumulate weighted intersection/union over an HW chunk.

    yp_ref / yt_ref : (TN, C, THW)   lane-dense spatial axis last
    w_ref           : (1, THW)
    coeff_ref       : (TN, C)        written on the last HW chunk only
    inter_acc/union_acc : (TN, C) f32 VMEM scratch accumulators
    """
    k = pl.program_id(1)

    @pl.when(k == 0)
    def _():
        inter_acc[...] = jnp.zeros_like(inter_acc)
        union_acc[...] = jnp.zeros_like(union_acc)

    p = yp_ref[...].astype(jnp.float32)
    t = yt_ref[...].astype(jnp.float32)
    w = w_ref[...].astype(jnp.float32)[None, :, :]    # (1, 1, THW) broadcasts over (TN, C)

    inter_acc[...] += jnp.sum(p * t * w, axis=-1)     # (TN, C)
    union_acc[...] += jnp.sum(w * (p + t), axis=-1)   # (TN, C)

    @pl.when(k == pl.num_programs(1) - 1)
    def _():
        coeff_ref[...] = (2.0 * inter_acc[...] + EPS) / (union_acc[...] + EPS)


@jax.jit
def correction_loss(y_pred, y_true, weight_map):
    """loss = 1 - mean_{n,c} [ (2*sum_hw(p*t*w) + eps) / (sum_hw(w*(p+t)) + eps) ]"""
    N, C, H, W = y_pred.shape
    HW = H * W

    yp = y_pred.reshape(N, C, HW)
    yt = y_true.reshape(N, C, HW)
    wm = weight_map.reshape(1, HW).astype(jnp.float32)

    tn, thw = _choose_tiles(N, C, HW, y_pred.dtype.itemsize)
    grid = (pl.cdiv(N, tn), pl.cdiv(HW, thw))

    coeff = pl.pallas_call(
        _correction_coeff_kernel,
        out_shape=jax.ShapeDtypeStruct((N, C), jnp.float32),
        grid_spec=pltpu.PrefetchScalarGridSpec(
            num_scalar_prefetch=0,
            grid=grid,
            in_specs=[
                pl.BlockSpec((tn, C, thw), lambda i, k: (i, 0, k)),
                pl.BlockSpec((tn, C, thw), lambda i, k: (i, 0, k)),
                pl.BlockSpec((1, thw), lambda i, k: (0, k)),
            ],
            out_specs=pl.BlockSpec((tn, C), lambda i, k: (i, 0)),
            scratch_shapes=[
                pltpu.VMEM((tn, C), jnp.float32),
                pltpu.VMEM((tn, C), jnp.float32),
            ],
        ),
        compiler_params=pltpu.CompilerParams(
            dimension_semantics=("parallel", "arbitrary"),  # batch parallel, HW reduction
            vmem_limit_bytes=_VMEM_LIMIT_BYTES,
        ),
        cost_estimate=pl.CostEstimate(
            flops=6 * N * C * HW,
            transcendentals=0,
            bytes_accessed=2 * N * C * HW * y_pred.dtype.itemsize + 4 * HW + 4 * N * C,
        ),
    )(yp, yt, wm)

    # Finalize (tiny N*C reduction) in the wrapper so the grid axis stays parallel.
    return 1.0 - jnp.mean(coeff)


class CorrectionLoss:
    """JAX/Pallas port of the PyTorch CorrectionLoss module."""

    def __init__(self, dims, inverted=False):
        # NOTE: faithfully reproduces the original __init__, which passes
        # `inverted` positionally into the `min_thresh` slot of
        # _get_weight_map (so min_thresh = float(inverted), inverted stays False).
        self.weight_map = _get_weight_map(dims, min_thresh=float(inverted))

    def __call__(self, y_pred, y_true):
        return correction_loss(y_pred, y_true, self.weight_map)


def _reference_loss(y_pred, y_true, weight_map):
    wb = weight_map[:, None, :, :]
    inter = jnp.sum(y_pred * y_true * wb, axis=(2, 3))
    union = jnp.sum(wb * (y_pred + y_true), axis=(2, 3))
    coeff = (2.0 * inter + EPS) / (union + EPS)
    return 1.0 - jnp.mean(coeff)


if __name__ == "__main__":
    key = jax.random.PRNGKey(0)
    k1, k2 = jax.random.split(key)

    N, C, H, W = 2, 4, 16, 16
    y_pred = jax.nn.sigmoid(jax.random.normal(k1, (N, C, H, W), dtype=jnp.float32))
    y_true = (jax.random.uniform(k2, (N, C, H, W)) > 0.5).astype(jnp.float32)

    loss_mod = CorrectionLoss(dims=(1, H, W), inverted=False)

    loss = loss_mod(y_pred, y_true)
    jax.block_until_ready(loss)

    ref = _reference_loss(y_pred, y_true, loss_mod.weight_map)
    assert jnp.allclose(loss, ref, atol=1e-5, rtol=1e-5), (loss, ref)

    print("KERNEL_OK")
</pallas_src>

<mosaic_0001>
module attributes {stable_mosaic.version = 11 : i64} {
  func.func @_correction_coeff_kernel(%arg0: i32, %arg1: i32, %arg2: memref<2x4x256xf32, #tpu.memory_space<vmem>>, %arg3: memref<2x4x256xf32, #tpu.memory_space<vmem>>, %arg4: memref<1x256xf32, #tpu.memory_space<vmem>>, %arg5: memref<2x4xf32, #tpu.memory_space<vmem>>, %arg6: memref<2x4xf32, #tpu.memory_space<vmem>>, %arg7: memref<2x4xf32, #tpu.memory_space<vmem>>) attributes {dimension_semantics = [#tpu.dimension_semantics<parallel>, #tpu.dimension_semantics<arbitrary>], iteration_bounds = array<i64: 1, 1>, scalar_prefetch = 0 : i64, scratch_operands = 2 : i64, tpu.core_type = #tpu.core_type<tc>, window_params = [{transform_indices = @transform_0, window_bounds = array<i64: 2, 4, 256>}, {transform_indices = @transform_1, window_bounds = array<i64: 2, 4, 256>}, {transform_indices = @transform_2, window_bounds = array<i64: 1, 256>}, {transform_indices = @transform_3, window_bounds = array<i64: 2, 4>}]} {
    %c0_i32 = arith.constant 0 : i32
    %0 = arith.cmpi eq, %arg1, %c0_i32 : i32
    %1 = arith.extui %0 : i1 to i32
    %c0_i32_0 = arith.constant 0 : i32
    %2 = arith.cmpi ne, %1, %c0_i32_0 : i32
    scf.if %2 {
      %cst_19 = arith.constant 0.000000e+00 : f32
      %24 = vector.broadcast %cst_19 : f32 to vector<2x4xf32>
      %c0_20 = arith.constant 0 : index
      %c0_21 = arith.constant 0 : index
      %25 = vector.load %arg6[%c0_20, %c0_21] : memref<2x4xf32, #tpu.memory_space<vmem>>, vector<2x4xf32>
      tpu.vector_store %arg6[%c0_20, %c0_21], %24 {strides = array<i32>} : memref<2x4xf32, #tpu.memory_space<vmem>>, vector<2x4xf32>,
      %cst_22 = arith.constant 0.000000e+00 : f32
      %26 = vector.broadcast %cst_22 : f32 to vector<2x4xf32>
      %c0_23 = arith.constant 0 : index
      %c0_24 = arith.constant 0 : index
      %27 = vector.load %arg7[%c0_23, %c0_24] : memref<2x4xf32, #tpu.memory_space<vmem>>, vector<2x4xf32>
      tpu.vector_store %arg7[%c0_23, %c0_24], %26 {strides = array<i32>} : memref<2x4xf32, #tpu.memory_space<vmem>>, vector<2x4xf32>,
    } else {
    }
    %c0 = arith.constant 0 : index
    %c0_1 = arith.constant 0 : index
    %c0_2 = arith.constant 0 : index
    %3 = vector.load %arg2[%c0, %c0_1, %c0_2] : memref<2x4x256xf32, #tpu.memory_space<vmem>>, vector<2x4x256xf32>
    %c0_3 = arith.constant 0 : index
    %c0_4 = arith.constant 0 : index
    %c0_5 = arith.constant 0 : index
    %4 = vector.load %arg3[%c0_3, %c0_4, %c0_5] : memref<2x4x256xf32, #tpu.memory_space<vmem>>, vector<2x4x256xf32>
    %c0_6 = arith.constant 0 : index
    %c0_7 = arith.constant 0 : index
    %5 = vector.load %arg4[%c0_6, %c0_7] : memref<1x256xf32, #tpu.memory_space<vmem>>, vector<1x256xf32>
    %6 = vector.shape_cast %5 : vector<1x256xf32> to vector<1x1x256xf32>
    %c0_8 = arith.constant 0 : index
    %c0_9 = arith.constant 0 : index
    %7 = vector.load %arg6[%c0_8, %c0_9] : memref<2x4xf32, #tpu.memory_space<vmem>>, vector<2x4xf32>
    %8 = arith.mulf %3, %4 : vector<2x4x256xf32>
    %9 = vector.broadcast %6 : vector<1x1x256xf32> to vector<2x4x256xf32>
    %10 = arith.mulf %8, %9 : vector<2x4x256xf32>
    %cst = arith.constant dense<0.000000e+00> : vector<2x4xf32>
    %11 = vector.multi_reduction <add>, %10, %cst [2] : vector<2x4x256xf32> to vector<2x4xf32>
    %12 = arith.addf %7, %11 : vector<2x4xf32>
    %c0_10 = arith.constant 0 : index
    %c0_11 = arith.constant 0 : index
    %13 = vector.load %arg6[%c0_10, %c0_11] : memref<2x4xf32, #tpu.memory_space<vmem>>, vector<2x4xf32>
    tpu.vector_store %arg6[%c0_10, %c0_11], %12 {strides = array<i32>} : memref<2x4xf32, #tpu.memory_space<vmem>>, vector<2x4xf32>,
    %c0_12 = arith.constant 0 : index
    %c0_13 = arith.constant 0 : index
    %14 = vector.load %arg7[%c0_12, %c0_13] : memref<2x4xf32, #tpu.memory_space<vmem>>, vector<2x4xf32>
    %15 = arith.addf %3, %4 : vector<2x4x256xf32>
    %16 = vector.broadcast %6 : vector<1x1x256xf32> to vector<2x4x256xf32>
    %17 = arith.mulf %16, %15 : vector<2x4x256xf32>
    %cst_14 = arith.constant dense<0.000000e+00> : vector<2x4xf32>
    %18 = vector.multi_reduction <add>, %17, %cst_14 [2] : vector<2x4x256xf32> to vector<2x4xf32>
    %19 = arith.addf %14, %18 : vector<2x4xf32>
    %c0_15 = arith.constant 0 : index
    %c0_16 = arith.constant 0 : index
    %20 = vector.load %arg7[%c0_15, %c0_16] : memref<2x4xf32, #tpu.memory_space<vmem>>, vector<2x4xf32>
    tpu.vector_store %arg7[%c0_15, %c0_16], %19 {strides = array<i32>} : memref<2x4xf32, #tpu.memory_space<vmem>>, vector<2x4xf32>,
    %c0_i32_17 = arith.constant 0 : i32
    %21 = arith.cmpi eq, %arg1, %c0_i32_17 : i32
    %22 = arith.extui %21 : i1 to i32
    %c0_i32_18 = arith.constant 0 : i32
    %23 = arith.cmpi ne, %22, %c0_i32_18 : i32
    scf.if %23 {
      %c0_19 = arith.constant 0 : index
      %c0_20 = arith.constant 0 : index
      %24 = vector.load %arg6[%c0_19, %c0_20] : memref<2x4xf32, #tpu.memory_space<vmem>>, vector<2x4xf32>
      %cst_21 = arith.constant 2.000000e+00 : f32
      %25 = vector.broadcast %cst_21 : f32 to vector<2x4xf32>
      %26 = arith.mulf %25, %24 : vector<2x4xf32>
      %cst_22 = arith.constant 9.99999997E-7 : f32
      %27 = vector.broadcast %cst_22 : f32 to vector<2x4xf32>
      %28 = arith.addf %26, %27 : vector<2x4xf32>
      %c0_23 = arith.constant 0 : index
      %c0_24 = arith.constant 0 : index
      %29 = vector.load %arg7[%c0_23, %c0_24] : memref<2x4xf32, #tpu.memory_space<vmem>>, vector<2x4xf32>
      %cst_25 = arith.constant 9.99999997E-7 : f32
      %30 = vector.broadcast %cst_25 : f32 to vector<2x4xf32>
      %31 = arith.addf %29, %30 : vector<2x4xf32>
      %32 = arith.divf %28, %31 : vector<2x4xf32>
      %c0_26 = arith.constant 0 : index
      %c0_27 = arith.constant 0 : index
      %33 = vector.load %arg5[%c0_26, %c0_27] : memref<2x4xf32, #tpu.memory_space<vmem>>, vector<2x4xf32>
      tpu.vector_store %arg5[%c0_26, %c0_27], %32 {strides = array<i32>} : memref<2x4xf32, #tpu.memory_space<vmem>>, vector<2x4xf32>,
    } else {
    }
    return
  }
  func.func @transform_0(%arg0: i32, %arg1: i32) -> (i32, i32, i32) {
    %c0_i32 = arith.constant 0 : i32
    %c0_i32_0 = arith.constant 0 : i32
    return %arg0, %c0_i32, %arg1 : i32, i32, i32
  }
  func.func @transform_1(%arg0: i32, %arg1: i32) -> (i32, i32, i32) {
    %c0_i32 = arith.constant 0 : i32
    %c0_i32_0 = arith.constant 0 : i32
    return %arg0, %c0_i32, %arg1 : i32, i32, i32
  }
  func.func @transform_2(%arg0: i32, %arg1: i32) -> (i32, i32) {
    %c0_i32 = arith.constant 0 : i32
    %c0_i32_0 = arith.constant 0 : i32
    return %c0_i32, %arg1 : i32, i32
  }
  func.func @transform_3(%arg0: i32, %arg1: i32) -> (i32, i32) {
    %c0_i32 = arith.constant 0 : i32
    %c0_i32_0 = arith.constant 0 : i32
    return %arg0, %c0_i32 : i32, i32
  }
}

</mosaic_0001>

<llo_original>
// kernel: correction_loss.1
$region0: #{correction_loss.1}
  #allocation0 [shape = 'u32[]', space=smem, size = 0x4, offset = 0x4, fixed_abs, tag = 'smem constant byte address 0x4 - core index']
  #allocation1 [shape = 'u32[144,128]{1,0:T(1,128)}', space=vmem, size = 0x12000, scoped, tag = 'internal scratch']
  #allocation2 [shape = 'f32[2,4]{1,0:T(2,128)}', space=vmem, size = 0x400, scoped, tag = 'scratch operand']
  #allocation3 [shape = 'f32[2,4]{1,0:T(2,128)}', space=vmem, size = 0x400, scoped, tag = 'scratch operand']
  %s0 = inlined_call_operand.vmem [shape: f32[2,4,256], index: 0, kind: input, shape index: {}]
  %s1 = inlined_call_operand.vmem [shape: f32[2,4,256], index: 1, kind: input, shape index: {}]
  %s2 = inlined_call_operand.vmem [shape: f32[1,256], index: 2, kind: input, shape index: {}]
  %s3 = inlined_call_operand.vmem [shape: f32[2,4], index: 3, kind: output, shape index: {}]
  %s4 = sld [smem:[#allocation0]]
  $region30: #{correction_loss.1} parent=0
    _
  %s6 = ssub.s32 1, %s4
  %s7 = scalar_select 0, %s6, %s4
  // Predicated region
  $region2: #{correction_loss.1} parent=0 // pred_check
    _
  $region3: #{correction_loss.1} parent=0 // pred_check_branch
    %9 = sbr.rel (0) target = $region5
  $region4: #{correction_loss.1} parent=0 // pred_region
    _
  $region5: #{correction_loss.1} parent=0 // pred_fallthru
    _
  // Predicated region
  $region6: #{correction_loss.1} parent=0 // pred_check
    _
  $region7: #{correction_loss.1} parent=0 // pred_check_branch
    %11 = sbr.rel (0) target = $region9
  $region8: #{correction_loss.1} parent=0 // pred_region
    _
  $region9: #{correction_loss.1} parent=0 // pred_fallthru
    _
  // Predicated region
  $region10: #{correction_loss.1} parent=0 // pred_check
    _
  $region11: #{correction_loss.1} parent=0 // pred_check_branch
    %13 = sbr.rel (0) target = $region13
  $region12: #{correction_loss.1} parent=0 // pred_region
    _
  $region13: #{correction_loss.1} parent=0 // pred_fallthru
    _
  %p14 = scmp.eq.s32.totalorder 0, 0
  // Predicated region
  $region14: #{correction_loss.1} parent=0 // pred_check
    %p15 = pneg %p14
  $region15: #{correction_loss.1} parent=0 // pred_check_branch
    %17 = sbr.rel (%p15) target = $region17
  $region16: #{correction_loss.1} parent=0 // pred_region
    %vm18 = vcmask 25600
    %19 = vst.msk [vmem:[#allocation2] sm:$0x3] %vm18, 0.0
    %20 = vst.msk [vmem:[#allocation3] sm:$0x3] %vm18, 0.0
  $region17: #{correction_loss.1} parent=0 // pred_fallthru
    _
  %v21 = vld [vmem:[%s0] sm:$0xff]
  %v22 = vld [vmem:[%s0 + $0x8] sm:$0xff]
  %v23 = vld [vmem:[%s1] sm:$0xff]
  %v24 = vld [vmem:[%s1 + $0x8] sm:$0xff]
  %v25 = vld [vmem:[%s2] sm:$0x3]
  %v26 = vld [vmem:[#allocation2] sm:$0x3]
  %v27 = vmul.f32 %v21, %v23
  %v28 = vmul.f32 %v22, %v24
  %v30 = vlaneseq
  %v31 = vshrl.u32 %v30, 7
  %v32 = vsub.s32 0, %v31
  %v33 = vrot.slane %v25, %v32
  %v34 = vlaneseq
  %v35 = vshrl.u32 %v34, 7
  %v36 = vsub.s32 1, %v35
  %v37 = vrot.slane %v25, %v36
  %v40 = vcombine.low %v33, %v37
  %v42 = vmul.f32 %v27, %v40
  %v43 = vmul.f32 %v28, %v40
  %v46 = vcombine.high %v42, %v42
  %v47 = vcombine.high %v43, %v43
  %vm50 = vcmask 1043456
  %v51 = vsel %vm50, %v42, 0.0
  %v52 = vsel %vm50, %v46, 0.0
  %v53 = vadd.f32 %v51, %v52
  %54 = vadd.xlane.f32.xlu0 %v53
  %v55 = vpop.xlane.xlu0 %54
  %v56 = vsel %vm50, %v43, 0.0
  %v57 = vsel %vm50, %v47, 0.0
  %v58 = vadd.f32 %v56, %v57
  %59 = vadd.xlane.f32.xlu0 %v58
  %v60 = vpop.xlane.xlu0 %59
  %v63 = vlaneseq
  %v64 = vand.u32 %v63, 127
  %v65 = vlaneseq
  %v66 = vshrl.u32 %v65, 7
  %v67 = vsub.s32 %v64, %v66
  %v68 = vrot.slane %v55, %v67
  %v69 = vlaneseq
  %v70 = vshrl.u32 %v69, 7
  %v71 = vsub.s32 %v64, %v70
  %v72 = vrot.slane %v60, %v71
  %vm73 = vcmask 1041409
  %v74 = vsel %vm73, %v72, %v68
  %v76 = vadd.f32 %v26, %v74
  %vm77 = vcmask 25600
  %78 = vst.msk [vmem:[#allocation2] sm:$0x3] %vm77, %v76
  %v79 = vld [vmem:[#allocation3] sm:$0x3]
  %v80 = vadd.f32 %v21, %v23
  %v81 = vadd.f32 %v22, %v24
  %v84 = vcombine.high %v80, %v80
  %v85 = vcombine.high %v81, %v81
  %v88 = vmul.f32 %v33, %v80
  %v89 = vmul.f32 %v37, %v84
  %v90 = vmul.f32 %v33, %v81
  %v91 = vmul.f32 %v37, %v85
  %v92 = vsel %vm50, %v88, 0.0
  %v93 = vsel %vm50, %v89, 0.0
  %v94 = vadd.f32 %v92, %v93
  %95 = vadd.xlane.f32.xlu0 %v94
  %v96 = vpop.xlane.xlu0 %95
  %v97 = vsel %vm50, %v90, 0.0
  %v98 = vsel %vm50, %v91, 0.0
  %v99 = vadd.f32 %v97, %v98
  %100 = vadd.xlane.f32.xlu0 %v99
  %v101 = vpop.xlane.xlu0 %100
  %v104 = vlaneseq
  %v105 = vshrl.u32 %v104, 7
  %v106 = vsub.s32 %v64, %v105
  %v107 = vrot.slane %v96, %v106
  %v108 = vlaneseq
  %v109 = vshrl.u32 %v108, 7
  %v110 = vsub.s32 %v64, %v109
  %v111 = vrot.slane %v101, %v110
  %v112 = vsel %vm73, %v111, %v107
  %v114 = vadd.f32 %v79, %v112
  %115 = vst.msk [vmem:[#allocation3] sm:$0x3] %vm77, %v114
  // Predicated region
  $region18: #{correction_loss.1} parent=0 // pred_check
    %p116 = pneg %p14
  $region19: #{correction_loss.1} parent=0 // pred_check_branch
    %118 = sbr.rel (%p116) target = $region21
  $region20: #{correction_loss.1} parent=0 // pred_region
    %v119 = vld [vmem:[#allocation2] sm:$0x3]
    %v120 = vmul.f32 %v119, 2.0
    %v121 = vadd.f32 %v120, 1e-06
    %v122 = vld [vmem:[#allocation3] sm:$0x3]
    %v123 = vadd.f32 %v122, 1e-06
    %v124 = vrcp.pop %v123
    %v125 = vmul.f32 %v121, %v124
    %126 = vst.msk [vmem:[%s3] sm:$0x3] %vm77, %v125
  $region21: #{correction_loss.1} parent=0 // pred_fallthru
    _
  // Predicated region
  $region22: #{correction_loss.1} parent=0 // pred_check
    _
  $region23: #{correction_loss.1} parent=0 // pred_check_branch
    %128 = sbr.rel (0) target = $region25
  $region24: #{correction_loss.1} parent=0 // pred_region
    _
  $region25: #{correction_loss.1} parent=0 // pred_fallthru
    _
  // Predicated region
  $region26: #{correction_loss.1} parent=0 // pred_check
    _
  $region27: #{correction_loss.1} parent=0 // pred_check_branch
    %130 = sbr.rel (0) target = $region29
  $region28: #{correction_loss.1} parent=0 // pred_region
    _
  $region29: #{correction_loss.1} parent=0 // pred_fallthru
    _

</llo_original>
